<compile_context>
chip_gen: v7x
topology: tpu7x:2x2x1
jax: 0.10.0
libtpu: 0.0.40
codegen_flags: <defaults>
</compile_context>

<pallas_src>
import functools
import math

import jax
import jax.numpy as jnp
from jax.experimental import pallas as pl
from jax.experimental.pallas import tpu as pltpu


def _specific_layer_norm_kernel(x_ref, theta_ref, bias_ref, o_ref, *, eps, mxu_reduce):
    # x_ref: (TILE_ROWS, H) block; theta_ref / bias_ref: (1, H) broadcast blocks.
    x = x_ref[...].astype(jnp.float32)
    h = x.shape[-1]
    inv_h = 1.0 / h

    if mxu_reduce:
        # Narrow H: the per-vreg cross-lane reduces would saturate the XLU before
        # the HBM feed; do the row sums on the (otherwise idle) MXU instead.
        ones = jnp.ones((h, 1), dtype=jnp.float32)
        mean = jnp.dot(x, ones, preferred_element_type=jnp.float32) * inv_h
        d = x - mean
        s2 = jnp.dot(d * d, ones, preferred_element_type=jnp.float32)
    else:
        mean = jnp.sum(x, axis=-1, keepdims=True) * inv_h
        d = x - mean
        s2 = jnp.sum(d * d, axis=-1, keepdims=True)

    var = s2 * inv_h                               # centered (population) variance
    inv = jax.lax.rsqrt(var + eps)

    theta = theta_ref[...]                         # f32, shape (1, H)
    bias = bias_ref[...]
    o_ref[...] = (d * (inv * theta) + bias).astype(o_ref.dtype)


def _round_up(x, m):
    return ((x + m - 1) // m) * m


def _device_caps():
    """(vmem_capacity_bytes, num_tensorcores) with safe fallbacks."""
    vmem_cap = 128 << 20
    try:
        vmem_cap = int(pltpu.get_tpu_info().vmem_capacity_bytes)
    except Exception:
        pass
    kind = ""
    try:
        kind = jax.devices()[0].device_kind.lower()
    except Exception:
        pass
    # v7x: 2 TensorCores per chip and 64 MiB VMEM per TC; v5e/v6e: 1 TC, 128 MiB.
    num_tc = 2 if ("v7" in kind or vmem_cap <= (64 << 20)) else 1
    return vmem_cap, num_tc


def _choose_tile_rows(rows, H, itemsize, vmem_cap, num_tc):
    """Row tile targeting ~2-4 MiB input blocks; generation-aware grid shaping."""
    # Sublane packing factor: 8 for f32, 16 for bf16, 32 for int8/fp8.
    sub = max(8, 32 // max(1, itemsize))
    row_bytes = max(1, H * itemsize)
    # Block byte target (1-4 MiB is the measured HBM-roofline sweet spot); keep it
    # smaller on v7x so double-buffering fits its 64 MiB VMEM comfortably.
    target = (4 << 20) if vmem_cap > (64 << 20) else (2 << 20)
    t = max(sub, (target // row_bytes) // sub * sub)

    if t >= rows:
        # Tiny/medium input: everything fits in one block.
        if num_tc >= 2 and rows >= 2 * sub:
            # v7x: split into two balanced blocks so both TensorCores get work.
            return int(min(_round_up((rows + 1) // 2, sub), rows))
        return int(rows)                           # block dim == full array dim

    if num_tc >= 2:
        # Prefer an even number of grid steps on v7x so the last step doesn't
        # leave one core idle.
        g = pl.cdiv(rows, t)
        if g > 1 and g % 2 == 1:
            t_even = max(sub, _round_up(pl.cdiv(rows, g + 1), sub))
            if pl.cdiv(rows, t_even) % 2 == 0:
                t = t_even
    return int(t)


def specific_layer_norm(data, theta, bias, eps=1e-5, tile_rows=None):
    """data: (..., H) array; theta/bias: (H,) arrays."""
    H = theta.shape[0]
    assert data.shape[-1] == H
    orig_shape = data.shape
    rows = int(math.prod(orig_shape[:-1]))
    x = data.reshape(rows, H)

    itemsize = jnp.dtype(data.dtype).itemsize
    vmem_cap, num_tc = _device_caps()
    if tile_rows is None:
        tile_rows = _choose_tile_rows(rows, H, itemsize, vmem_cap, num_tc)
    tile_rows = int(min(tile_rows, rows))

    grid = (pl.cdiv(rows, tile_rows),)   # partial last block handled by Pallas masking

    theta2 = theta.reshape(1, H).astype(jnp.float32)
    bias2 = bias.reshape(1, H).astype(jnp.float32)

    # Scoped VMEM budget: double-buffered in + out blocks + params + the f32
    # working copies the kernel materializes for sub-32-bit inputs, with headroom,
    # clamped to a generation-aware fraction of physical VMEM.
    block_in = tile_rows * H * itemsize
    block_out = block_in
    params = 2 * 2 * H * 4
    f32_work = 0 if itemsize >= 4 else 2 * tile_rows * H * 4
    needed = 2 * (block_in + block_out) + params + f32_work
    cap = int(vmem_cap * 3 // 4)                       # ~48 MiB v7x, ~96 MiB v5e/v6e
    vmem_limit = int(min(max(needed + needed // 2, 32 << 20), cap))

    mxu_reduce = H <= 256   # offload row sums to the MXU for narrow hidden sizes

    out = pl.pallas_call(
        functools.partial(
            _specific_layer_norm_kernel, eps=float(eps), mxu_reduce=mxu_reduce
        ),
        out_shape=jax.ShapeDtypeStruct((rows, H), data.dtype),
        grid_spec=pltpu.PrefetchScalarGridSpec(
            num_scalar_prefetch=0,
            grid=grid,
            in_specs=[
                pl.BlockSpec((tile_rows, H), lambda i: (i, 0)),
                pl.BlockSpec((1, H), lambda i: (0, 0)),
                pl.BlockSpec((1, H), lambda i: (0, 0)),
            ],
            out_specs=pl.BlockSpec((tile_rows, H), lambda i: (i, 0)),
        ),
        compiler_params=pltpu.CompilerParams(
            dimension_semantics=("parallel",),
            vmem_limit_bytes=vmem_limit,
        ),
    )(x, theta2, bias2)

    return out.reshape(orig_shape)


def build_specific_layernorm_params(key, hidden, atten_default=0.8):
    """Deterministic synthetic init mirroring SpecificLayer.__init__ / init_training_weights."""
    k_gw, k_bias = jax.random.split(key)
    # global_weight of a LayerNorm has shape (H,); module reshapes it to (H, 1).
    global_weight = jax.random.normal(k_gw, (hidden,), dtype=jnp.float32) * 0.1 + 1.0
    global_weight_r = global_weight.reshape(hidden, 1)
    # global_weight_atten = ones(global_weight_r.shape[-1]) * atten_default  -> shape (1,)
    global_weight_atten = jnp.ones((1,), dtype=jnp.float32) * atten_default
    # Specific_weight = (1 - atten) * global_weight_r  -> shape (H, 1)
    specific_weight = (1.0 - global_weight_atten) * global_weight_r
    # Specific_bias: LayerNorm bias, shape (H,)
    specific_bias = jax.random.normal(k_bias, (hidden,), dtype=jnp.float32) * 0.05
    return global_weight_r, global_weight_atten, specific_weight, specific_bias


def _reference(data, theta, bias, eps):
    xf = data.astype(jnp.float32)
    mean = jnp.mean(xf, axis=-1, keepdims=True)
    var = jnp.mean((xf - mean) ** 2, axis=-1, keepdims=True)
    return ((xf - mean) / jnp.sqrt(var + eps) * theta + bias).astype(data.dtype)


if __name__ == "__main__":
    key = jax.random.PRNGKey(0)
    k_data, k_params, k_data2 = jax.random.split(key, 3)

    eps = 1e-5

    # --- Case 1: small, lane-dense hidden dim (multiple of 128) ---------------
    B, S, H = 2, 8, 128          # data: (batch, seq, hidden); normalized_shape = (H,)
    data = jax.random.normal(k_data, (B, S, H), dtype=jnp.float32)
    gw, atten, sw, sb = build_specific_layernorm_params(k_params, H)

    # Parameter glue (tiny, stays in plain JAX):
    # theta = sum(atten * global_weight, dim=-1) + squeeze(Specific_weight, -1)
    theta = jnp.sum(atten * gw, axis=-1) + jnp.squeeze(sw, axis=-1)   # (H,)
    bias = sb                                                          # (H,)

    out = specific_layer_norm(data, theta, bias, eps=eps)
    out = jax.block_until_ready(out)
    ref = _reference(data, theta, bias, eps)
    assert out.shape == data.shape
    assert jnp.max(jnp.abs(out - ref)) < 1e-4, "mismatch vs reference layer_norm (case 1)"

    # --- Case 2: unaligned row count, auto tile selection ---------------------
    B2, S2, H2 = 5, 200, 256     # rows = 1000
    data2 = jax.random.normal(k_data2, (B2, S2, H2), dtype=jnp.float32)
    gw2, atten2, sw2, sb2 = build_specific_layernorm_params(k_params, H2)
    theta2 = jnp.sum(atten2 * gw2, axis=-1) + jnp.squeeze(sw2, axis=-1)
    out2 = specific_layer_norm(data2, theta2, sb2, eps=eps)
    out2 = jax.block_until_ready(out2)
    ref2 = _reference(data2, theta2, sb2, eps)
    assert out2.shape == data2.shape
    assert jnp.max(jnp.abs(out2 - ref2)) < 1e-4, "mismatch vs reference layer_norm (case 2)"

    # --- Case 3: forced small tile to exercise the partial last block ---------
    out3 = specific_layer_norm(data2, theta2, sb2, eps=eps, tile_rows=128)
    out3 = jax.block_until_ready(out3)
    assert jnp.max(jnp.abs(out3 - ref2)) < 1e-4, "mismatch vs reference layer_norm (case 3)"

    print("KERNEL_OK")
</pallas_src>

<mosaic_0001>
module attributes {stable_mosaic.version = 11 : i64} {
  func.func @_specific_layer_norm_kernel(%arg0: i32, %arg1: memref<16x128xf32, #tpu.memory_space<vmem>>, %arg2: memref<1x128xf32, #tpu.memory_space<vmem>>, %arg3: memref<1x128xf32, #tpu.memory_space<vmem>>, %arg4: memref<16x128xf32, #tpu.memory_space<vmem>>) attributes {dimension_semantics = [#tpu.dimension_semantics<parallel>], iteration_bounds = array<i64: 1>, scalar_prefetch = 0 : i64, scratch_operands = 0 : i64, tpu.core_type = #tpu.core_type<tc>, window_params = [{transform_indices = @transform_0, window_bounds = array<i64: 16, 128>}, {pipeline_mode = #tpu.pipeline_mode<synchronous>, transform_indices = @transform_1, window_bounds = array<i64: 1, 128>}, {pipeline_mode = #tpu.pipeline_mode<synchronous>, transform_indices = @transform_2, window_bounds = array<i64: 1, 128>}, {transform_indices = @transform_3, window_bounds = array<i64: 16, 128>}]} {
    %c0 = arith.constant 0 : index
    %c0_0 = arith.constant 0 : index
    %0 = vector.load %arg1[%c0, %c0_0] : memref<16x128xf32, #tpu.memory_space<vmem>>, vector<16x128xf32>
    %cst = arith.constant 1.000000e+00 : f32
    %1 = vector.broadcast %cst : f32 to vector<128x1xf32>
    %cst_1 = arith.constant dense<0.000000e+00> : vector<16x1xf32>
    %2 = tpu.matmul %0, %1, %cst_1 {dimension_numbers = #tpu.dot_dimension_numbers<[1], [0], [0], [1], [0, 0, 1, 1], [], []>} : vector<16x128xf32>, vector<128x1xf32>, vector<16x1xf32> -> vector<16x1xf32>
    %cst_2 = arith.constant 7.812500e-03 : f32
    %3 = vector.broadcast %cst_2 : f32 to vector<16x1xf32>
    %4 = arith.mulf %2, %3 : vector<16x1xf32>
    %5 = vector.broadcast %4 : vector<16x1xf32> to vector<16x128xf32>
    %6 = arith.subf %0, %5 : vector<16x128xf32>
    %7 = arith.mulf %6, %6 : vector<16x128xf32>
    %cst_3 = arith.constant dense<0.000000e+00> : vector<16x1xf32>
    %8 = tpu.matmul %7, %1, %cst_3 {dimension_numbers = #tpu.dot_dimension_numbers<[1], [0], [0], [1], [0, 0, 1, 1], [], []>} : vector<16x128xf32>, vector<128x1xf32>, vector<16x1xf32> -> vector<16x1xf32>
    %cst_4 = arith.constant 7.812500e-03 : f32
    %9 = vector.broadcast %cst_4 : f32 to vector<16x1xf32>
    %10 = arith.mulf %8, %9 : vector<16x1xf32>
    %cst_5 = arith.constant 9.99999974E-6 : f32
    %11 = vector.broadcast %cst_5 : f32 to vector<16x1xf32>
    %12 = arith.addf %10, %11 : vector<16x1xf32>
    %13 = math.rsqrt %12 : vector<16x1xf32>
    %c0_6 = arith.constant 0 : index
    %c0_7 = arith.constant 0 : index
    %14 = vector.load %arg2[%c0_6, %c0_7] : memref<1x128xf32, #tpu.memory_space<vmem>>, vector<1x128xf32>
    %c0_8 = arith.constant 0 : index
    %c0_9 = arith.constant 0 : index
    %15 = vector.load %arg3[%c0_8, %c0_9] : memref<1x128xf32, #tpu.memory_space<vmem>>, vector<1x128xf32>
    %16 = vector.broadcast %13 : vector<16x1xf32> to vector<16x128xf32>
    %17 = vector.broadcast %14 : vector<1x128xf32> to vector<16x128xf32>
    %18 = arith.mulf %16, %17 : vector<16x128xf32>
    %19 = arith.mulf %6, %18 : vector<16x128xf32>
    %20 = vector.broadcast %15 : vector<1x128xf32> to vector<16x128xf32>
    %21 = arith.addf %19, %20 : vector<16x128xf32>
    %c0_10 = arith.constant 0 : index
    %c0_11 = arith.constant 0 : index
    %22 = vector.load %arg4[%c0_10, %c0_11] : memref<16x128xf32, #tpu.memory_space<vmem>>, vector<16x128xf32>
    tpu.vector_store %arg4[%c0_10, %c0_11], %21 {strides = array<i32>} : memref<16x128xf32, #tpu.memory_space<vmem>>, vector<16x128xf32>,
    return
  }
  func.func @transform_0(%arg0: i32) -> (i32, i32) {
    %c0_i32 = arith.constant 0 : i32
    %c0_i32_0 = arith.constant 0 : i32
    return %arg0, %c0_i32 : i32, i32
  }
  func.func @transform_1(%arg0: i32) -> (i32, i32) {
    %c0_i32 = arith.constant 0 : i32
    %c0_i32_0 = arith.constant 0 : i32
    %c0_i32_1 = arith.constant 0 : i32
    return %c0_i32, %c0_i32_0 : i32, i32
  }
  func.func @transform_2(%arg0: i32) -> (i32, i32) {
    %c0_i32 = arith.constant 0 : i32
    %c0_i32_0 = arith.constant 0 : i32
    %c0_i32_1 = arith.constant 0 : i32
    return %c0_i32, %c0_i32_0 : i32, i32
  }
  func.func @transform_3(%arg0: i32) -> (i32, i32) {
    %c0_i32 = arith.constant 0 : i32
    %c0_i32_0 = arith.constant 0 : i32
    return %arg0, %c0_i32 : i32, i32
  }
}

</mosaic_0001>

<llo_original>
// kernel: tpu_custom_call.1
$region0: #{tpu_custom_call.1}
  #allocation0 [shape = 'u32[]', space=smem, size = 0x4, offset = 0x4, fixed_abs, tag = 'smem constant byte address 0x4 - core index']
  #allocation1 [shape = 'u32[144,128]{1,0:T(1,128)}', space=vmem, size = 0x12000, scoped, tag = 'internal scratch']
  %s0 = inlined_call_operand.hbm [shape: f32[16,128], index: 0, kind: input, shape index: {}]
  %s1 = inlined_call_operand.vmem [shape: f32[1,128], index: 1, kind: input, shape index: {}]
  %s2 = inlined_call_operand.vmem [shape: f32[1,128], index: 2, kind: input, shape index: {}]
  %s3 = inlined_call_operand.hbm [shape: f32[16,128], index: 3, kind: output, shape index: {}]
  %s4 = sld [smem:[#allocation0]]
  $region26: #{tpu_custom_call.1} parent=0
    _
  %s6 = ssub.s32 1, %s4
  %s7 = scalar_select 0, %s6, %s4
  $region1: #{tpu_custom_call.1} parent=0
    #allocation2 [shape = 'u8[8192]{0}', space=vmem, size = 0x2000, scoped, tag = 'input window, operand 0, single buffered']
    #allocation3 [shape = 's32[1]{0}', space=sflag, size = 0x4, scoped, tag = 'scoped memory for tpu_custom_call.1']
    #allocation4 [shape = 's32[1]{0}', space=sflag, size = 0x4, scoped, tag = 'scoped memory for tpu_custom_call.1']
    #allocation5 [shape = 'u8[8192]{0}', space=vmem, size = 0x2000, scoped, tag = 'output window, operand 0, single buffered']
    %8 = vsyncpa [#allocation3], 0
    %9 = vsyncpa [#allocation4], 0
    // Predicated region
    $region2: #{tpu_custom_call.1} parent=1 // pred_check
      _
    $region3: #{tpu_custom_call.1} parent=1 // pred_check_branch
      %11 = sbr.rel (0) target = $region5
    $region4: #{tpu_custom_call.1} parent=1 // pred_region
      %s13 = ssub.s32 256, 256
      %14 = vsyncadd [#allocation3], %s13
      %s15 = sshll.u32 [#allocation2], 4
      %s16 = int_to_ptr.vmem [resolvable:$true] %s15
      %21 = dma.hbm_to_vmem [thread:$0]  %s0, 256, %s16, [#allocation3], 128, 128, 8
    $region5: #{tpu_custom_call.1} parent=1 // pred_fallthru
      _
    // Predicated region
    $region6: #{tpu_custom_call.1} parent=1 // pred_check
      _
    $region7: #{tpu_custom_call.1} parent=1 // pred_check_branch
      %23 = sbr.rel (0) target = $region9
    $region8: #{tpu_custom_call.1} parent=1 // pred_region
      _
    $region9: #{tpu_custom_call.1} parent=1 // pred_fallthru
      _
    // Predicated region
    $region10: #{tpu_custom_call.1} parent=1 // pred_check
      _
    $region11: #{tpu_custom_call.1} parent=1 // pred_check_branch
      %25 = sbr.rel (0) target = $region13
    $region12: #{tpu_custom_call.1} parent=1 // pred_region
      _
    $region13: #{tpu_custom_call.1} parent=1 // pred_fallthru
      _
    // Predicated region
    $region14: #{tpu_custom_call.1} parent=1 // pred_check
      _
    $region15: #{tpu_custom_call.1} parent=1 // pred_check_branch
      %27 = sbr.rel (0) target = $region17
    $region16: #{tpu_custom_call.1} parent=1 // pred_region
      %28 = dma.done [#allocation3], 256
    $region17: #{tpu_custom_call.1} parent=1 // pred_fallthru
      _
    %v29 = vld [vmem:[#allocation2] sm:$0xff]
    %v30 = vld [vmem:[#allocation2 + $0x8] sm:$0xff]
    %31 = vmatprep.subr.mxu0 0.0
    %32 = vmatpush1.msra.mxu0 1.0
    %33 = vmatprep.subr.mxu0 0.0
    %34 = vmatpush1.msra.mxu0 1.0
    %35 = vmatprep.subr.mxu0 0.0
    %36 = vmatpush1.msra.mxu0 1.0
    %37 = vmatprep.subr.mxu0 0.0
    %38 = vmatpush1.msra.mxu0 1.0
    %39 = vmatprep.subr.mxu0 0.0
    %40 = vmatpush1.msra.mxu0 1.0
    %41 = vmatprep.subr.mxu0 0.0
    %42 = vmatpush1.msra.mxu0 1.0
    %43 = vmatprep.subr.mxu0 0.0
    %44 = vmatpush1.msra.mxu0 1.0
    %45 = vmatprep.subr.mxu0 0.0
    %46 = vmatpush1.msra.mxu0 1.0
    %47 = vmatprep.subr.mxu0 0.0
    %48 = vmatpush1.msra.mxu0 1.0
    %49 = vmatprep.subr.mxu0 0.0
    %50 = vmatpush1.msra.mxu0 1.0
    %51 = vmatprep.subr.mxu0 0.0
    %52 = vmatpush1.msra.mxu0 1.0
    %53 = vmatprep.subr.mxu0 0.0
    %54 = vmatpush1.msra.mxu0 1.0
    %55 = vmatprep.subr.mxu0 0.0
    %56 = vmatpush1.msra.mxu0 1.0
    %57 = vmatprep.subr.mxu0 0.0
    %58 = vmatpush1.msra.mxu0 1.0
    %59 = vmatprep.subr.mxu0 0.0
    %60 = vmatpush1.msra.mxu0 1.0
    %61 = vmatprep.subr.mxu0 0.0
    %62 = vmatpush1.msra.mxu0 1.0
    %63 = vmatprep.subr.mxu0 0.0
    %64 = vmatpush1.msra.mxu0 0.0
    %65 = vmatprep.subr.mxu0 0.0
    %66 = vmatpush1.msra.mxu0 0.0
    %67 = vmatprep.subr.mxu0 0.0
    %68 = vmatpush1.msra.mxu0 0.0
    %69 = vmatprep.subr.mxu0 0.0
    %70 = vmatpush1.msra.mxu0 0.0
    %71 = vmatprep.subr.mxu0 0.0
    %72 = vmatpush1.msra.mxu0 0.0
    %73 = vmatprep.subr.mxu0 0.0
    %74 = vmatpush1.msra.mxu0 0.0
    %75 = vmatprep.subr.mxu0 0.0
    %76 = vmatpush1.msra.mxu0 0.0
    %77 = vmatprep.subr.mxu0 0.0
    %78 = vmatpush1.msra.mxu0 0.0
    %79 = vmatprep.subr.mxu0 0.0
    %80 = vmatpush1.msra.mxu0 0.0
    %81 = vmatprep.subr.mxu0 0.0
    %82 = vmatpush1.msra.mxu0 0.0
    %83 = vmatprep.subr.mxu0 0.0
    %84 = vmatpush1.msra.mxu0 0.0
    %85 = vmatprep.subr.mxu0 0.0
    %86 = vmatpush1.msra.mxu0 0.0
    %87 = vmatprep.subr.mxu0 0.0
    %88 = vmatpush1.msra.mxu0 0.0
    %89 = vmatprep.subr.mxu0 0.0
    %90 = vmatpush1.msra.mxu0 0.0
    %91 = vmatprep.subr.mxu0 0.0
    %92 = vmatpush1.msra.mxu0 0.0
    %93 = vmatprep.subr.mxu0 0.0
    %94 = vmatpush1.msra.mxu0 0.0
    %95 = vmatprep.mubr.f32.mxu0 0.0
    %96 = vmatmul.mubr.f32.gmra.mrb[0].mxu0 %v29
    %v97 = vpop.f32.mrb[0].mxu0
    %v98 = vadd.f32 0.0, %v97
    %v99 = vpop.f32.mrb[0].mxu0
    %100 = vmatprep.mubr.f32.mxu0 0.0
    %101 = vmatmul.mubr.f32.gmra.mrb[0].mxu0 %v30
    %v102 = vpop.f32.mrb[0].mxu0
    %v103 = vadd.f32 0.0, %v102
    %v104 = vpop.f32.mrb[0].mxu0
    %105 = vdwg.mxu0
    %v106 = vmul.f32 %v98, 0.0078125
    %v107 = vmul.f32 %v103, 0.0078125
    %109 = vset.pattern.permute.xlu0 0
    %110 = vperm.xlu0 %109, %v106
    %v111 = vpop.permute.xlu0 %110
    %114 = vset.pattern.permute.xlu0 0
    %115 = vperm.xlu0 %114, %v107
    %v116 = vpop.permute.xlu0 %115
    %v118 = vsub.f32 %v29, %v111
    %v119 = vsub.f32 %v30, %v116
    %v120 = vmul.f32 %v118, %v118
    %v121 = vmul.f32 %v119, %v119
    %122 = vmatprep.subr.mxu0 0.0
    %123 = vmatpush1.msra.mxu0 1.0
    %124 = vmatprep.subr.mxu0 0.0
    %125 = vmatpush1.msra.mxu0 1.0
    %126 = vmatprep.subr.mxu0 0.0
    %127 = vmatpush1.msra.mxu0 1.0
    %128 = vmatprep.subr.mxu0 0.0
    %129 = vmatpush1.msra.mxu0 1.0
    %130 = vmatprep.subr.mxu0 0.0
    %131 = vmatpush1.msra.mxu0 1.0
    %132 = vmatprep.subr.mxu0 0.0
    %133 = vmatpush1.msra.mxu0 1.0
    %134 = vmatprep.subr.mxu0 0.0
    %135 = vmatpush1.msra.mxu0 1.0
    %136 = vmatprep.subr.mxu0 0.0
    %137 = vmatpush1.msra.mxu0 1.0
    %138 = vmatprep.subr.mxu0 0.0
    %139 = vmatpush1.msra.mxu0 1.0
    %140 = vmatprep.subr.mxu0 0.0
    %141 = vmatpush1.msra.mxu0 1.0
    %142 = vmatprep.subr.mxu0 0.0
    %143 = vmatpush1.msra.mxu0 1.0
    %144 = vmatprep.subr.mxu0 0.0
    %145 = vmatpush1.msra.mxu0 1.0
    %146 = vmatprep.subr.mxu0 0.0
    %147 = vmatpush1.msra.mxu0 1.0
    %148 = vmatprep.subr.mxu0 0.0
    %149 = vmatpush1.msra.mxu0 1.0
    %150 = vmatprep.subr.mxu0 0.0
    %151 = vmatpush1.msra.mxu0 1.0
    %152 = vmatprep.subr.mxu0 0.0
    %153 = vmatpush1.msra.mxu0 1.0
    %154 = vmatprep.subr.mxu0 0.0
    %155 = vmatpush1.msra.mxu0 0.0
    %156 = vmatprep.subr.mxu0 0.0
    %157 = vmatpush1.msra.mxu0 0.0
    %158 = vmatprep.subr.mxu0 0.0
    %159 = vmatpush1.msra.mxu0 0.0
    %160 = vmatprep.subr.mxu0 0.0
    %161 = vmatpush1.msra.mxu0 0.0
    %162 = vmatprep.subr.mxu0 0.0
    %163 = vmatpush1.msra.mxu0 0.0
    %164 = vmatprep.subr.mxu0 0.0
    %165 = vmatpush1.msra.mxu0 0.0
    %166 = vmatprep.subr.mxu0 0.0
    %167 = vmatpush1.msra.mxu0 0.0
    %168 = vmatprep.subr.mxu0 0.0
    %169 = vmatpush1.msra.mxu0 0.0
    %170 = vmatprep.subr.mxu0 0.0
    %171 = vmatpush1.msra.mxu0 0.0
    %172 = vmatprep.subr.mxu0 0.0
    %173 = vmatpush1.msra.mxu0 0.0
    %174 = vmatprep.subr.mxu0 0.0
    %175 = vmatpush1.msra.mxu0 0.0
    %176 = vmatprep.subr.mxu0 0.0
    %177 = vmatpush1.msra.mxu0 0.0
    %178 = vmatprep.subr.mxu0 0.0
    %179 = vmatpush1.msra.mxu0 0.0
    %180 = vmatprep.subr.mxu0 0.0
    %181 = vmatpush1.msra.mxu0 0.0
    %182 = vmatprep.subr.mxu0 0.0
    %183 = vmatpush1.msra.mxu0 0.0
    %184 = vmatprep.subr.mxu0 0.0
    %185 = vmatpush1.msra.mxu0 0.0
    %186 = vmatprep.mubr.f32.mxu0 0.0
    %187 = vmatmul.mubr.f32.gmra.mrb[0].mxu0 %v120
    %v188 = vpop.f32.mrb[0].mxu0
    %v189 = vadd.f32 0.0, %v188
    %v190 = vpop.f32.mrb[0].mxu0
    %191 = vmatprep.mubr.f32.mxu0 0.0
    %192 = vmatmul.mubr.f32.gmra.mrb[0].mxu0 %v121
    %v193 = vpop.f32.mrb[0].mxu0
    %v194 = vadd.f32 0.0, %v193
    %v195 = vpop.f32.mrb[0].mxu0
    %196 = vdwg.mxu0
    %v197 = vmul.f32 %v189, 0.0078125
    %v198 = vmul.f32 %v194, 0.0078125
    %v199 = vadd.f32 %v197, 1e-05
    %v200 = vadd.f32 %v198, 1e-05
    %v201 = vrsqrt.pop %v199
    %v202 = vrsqrt.pop %v200
    %v203 = vld [vmem:[%s1] sm:$0x1]
    %v204 = vld [vmem:[%s2] sm:$0x1]
    %206 = vset.pattern.permute.xlu0 0
    %207 = vperm.xlu0 %206, %v201
    %v208 = vpop.permute.xlu0 %207
    %211 = vset.pattern.permute.xlu0 0
    %212 = vperm.xlu0 %211, %v202
    %v213 = vpop.permute.xlu0 %212
    %v216 = vlaneseq
    %v217 = vshrl.u32 %v216, 7
    %v218 = vsub.s32 0, %v217
    %v219 = vrot.slane %v203, %v218
    %v221 = vmul.f32 %v208, %v219
    %v222 = vmul.f32 %v213, %v219
    %v223 = vmul.f32 %v118, %v221
    %v224 = vmul.f32 %v119, %v222
    %v226 = vlaneseq
    %v227 = vshrl.u32 %v226, 7
    %v228 = vsub.s32 0, %v227
    %v229 = vrot.slane %v204, %v228
    %v231 = vadd.f32 %v223, %v229
    %v232 = vadd.f32 %v224, %v229
    %233 = vst [vmem:[#allocation5] sm:$0xff] %v231
    %234 = vst [vmem:[#allocation5 + $0x8] sm:$0xff] %v232
    // Predicated region
    $region18: #{tpu_custom_call.1} parent=1 // pred_check
      _
    $region19: #{tpu_custom_call.1} parent=1 // pred_check_branch
      %236 = sbr.rel (0) target = $region21
    $region20: #{tpu_custom_call.1} parent=1 // pred_region
      %s238 = ssub.s32 256, 256
      %239 = vsyncadd [#allocation4], %s238
      %s240 = sshll.u32 [#allocation5], 4
      %s241 = int_to_ptr.vmem [resolvable:$true] %s240
      %246 = dma.vmem_to_hbm [thread:$0]  %s241, 256, %s3, [#allocation4], 128, 128, 8
    $region21: #{tpu_custom_call.1} parent=1 // pred_fallthru
      _
    // Predicated region
    $region22: #{tpu_custom_call.1} parent=1 // pred_check
      _
    $region23: #{tpu_custom_call.1} parent=1 // pred_check_branch
      %248 = sbr.rel (0) target = $region25
    $region24: #{tpu_custom_call.1} parent=1 // pred_region
      %249 = dma.done [#allocation4], 256
    $region25: #{tpu_custom_call.1} parent=1 // pred_fallthru
      _
    %250 = vsyncpa [#allocation3], 1
    %251 = vsyncpa [#allocation4], 1

</llo_original>
